<compile_context>
chip_gen: v5e
topology: v5e:2x2
jax: 0.10.0
libtpu: 0.0.40
codegen_flags: <defaults>
</compile_context>

<pallas_src>
import jax
import jax.numpy as jnp
from jax.experimental import pallas as pl
from jax.experimental.pallas import tpu as pltpu

K = 3          # MaxPool2d(kernel_size=3): 3x3 window, stride 3, floor mode
LANE = 128     # TPU lane width
SUB = 8        # TPU sublane count (f32)


def _maxpool_kernel(x_ref, o_ref):
    # x_ref: (K*K, RB, 128) -- 9 window-offset slabs in native (8,128) tiling
    # o_ref: (RB, 128)
    m = x_ref[0]
    for r in range(1, K * K):          # 8 elementwise maximums -> VPU only
        m = jnp.maximum(m, x_ref[r])
    o_ref[...] = m


def maxpool2d_k3(x, block_rows=512):
    N, C, H, W = x.shape
    Ho = (H - K) // K + 1              # ceil_mode=False -> floor
    Wo = (W - K) // K + 1
    P = N * C * Ho * Wo                # total number of output elements

    # Build the 9 strided views: slab (kh, kw) holds window element (kh, kw)
    # of every 3x3 window, flattened to length P (layout-only glue in XLA).
    slabs = []
    for kh in range(K):
        for kw in range(K):
            s = x[:, :, kh:kh + (Ho - 1) * K + 1:K, kw:kw + (Wo - 1) * K + 1:K]
            slabs.append(s.reshape(P))
    xs = jnp.stack(slabs, axis=0)      # (9, P)

    # Lane-dense padded layout: each slab becomes a (Rtot, 128) plane whose row
    # count is a multiple of the per-block row count rb (itself a multiple of 8).
    rows_needed = pl.cdiv(P, LANE)
    if rows_needed > block_rows:
        rb = block_rows                           # 512*128*4B = 256 KiB per slab per block
    else:
        rb = pl.cdiv(rows_needed, SUB) * SUB      # small input: single block
    grid_n = pl.cdiv(rows_needed, rb)
    rtot = grid_n * rb
    p_pad = rtot * LANE
    if p_pad > P:
        xs = jnp.pad(xs, ((0, 0), (0, p_pad - P)))   # pad values are cropped later
    xs = xs.reshape(K * K, rtot, LANE)

    out = pl.pallas_call(
        _maxpool_kernel,
        out_shape=jax.ShapeDtypeStruct((rtot, LANE), x.dtype),
        grid=(grid_n,),
        in_specs=[pl.BlockSpec((K * K, rb, LANE), lambda i: (0, i, 0))],
        out_specs=pl.BlockSpec((rb, LANE), lambda i: (i, 0)),
        compiler_params=pltpu.CompilerParams(
            dimension_semantics=("parallel",)),
    )(xs)

    return out.reshape(p_pad)[:P].reshape(N, C, Ho, Wo)


if __name__ == "__main__":
    key = jax.random.PRNGKey(0)
    x = jax.random.normal(key, (2, 4, 16, 16), dtype=jnp.float32)  # NCHW

    y = jax.block_until_ready(maxpool2d_k3(x))

    # Pure-JAX reference matching torch.nn.MaxPool2d(kernel_size=3, ceil_mode=False)
    ref = jax.lax.reduce_window(
        x, -jnp.inf, jax.lax.max,
        window_dimensions=(1, 1, K, K),
        window_strides=(1, 1, K, K),
        padding="VALID",
    )
    assert y.shape == (2, 4, 5, 5), y.shape
    assert jnp.array_equal(y, ref), "Pallas maxpool mismatch vs reference"
    print("KERNEL_OK")
</pallas_src>

<mosaic_0001>
module attributes {stable_mosaic.version = 11 : i64} {
  func.func @_maxpool_kernel(%arg0: i32, %arg1: memref<9x8x128xf32, #tpu.memory_space<vmem>>, %arg2: memref<8x128xf32, #tpu.memory_space<vmem>>) attributes {dimension_semantics = [#tpu.dimension_semantics<parallel>], iteration_bounds = array<i64: 1>, scalar_prefetch = 0 : i64, scratch_operands = 0 : i64, tpu.core_type = #tpu.core_type<tc>, window_params = [{transform_indices = @transform_0, window_bounds = array<i64: 9, 8, 128>}, {transform_indices = @transform_1, window_bounds = array<i64: 8, 128>}]} {
    %c0 = arith.constant 0 : index
    %c0_0 = arith.constant 0 : index
    %c0_1 = arith.constant 0 : index
    %0 = vector.load %arg1[%c0, %c0_0, %c0_1] : memref<9x8x128xf32, #tpu.memory_space<vmem>>, vector<1x8x128xf32>
    %1 = vector.shape_cast %0 : vector<1x8x128xf32> to vector<8x128xf32>
    %c1 = arith.constant 1 : index
    %c0_2 = arith.constant 0 : index
    %c0_3 = arith.constant 0 : index
    %2 = vector.load %arg1[%c1, %c0_2, %c0_3] : memref<9x8x128xf32, #tpu.memory_space<vmem>>, vector<1x8x128xf32>
    %3 = vector.shape_cast %2 : vector<1x8x128xf32> to vector<8x128xf32>
    %4 = arith.maximumf %1, %3 : vector<8x128xf32>
    %c2 = arith.constant 2 : index
    %c0_4 = arith.constant 0 : index
    %c0_5 = arith.constant 0 : index
    %5 = vector.load %arg1[%c2, %c0_4, %c0_5] : memref<9x8x128xf32, #tpu.memory_space<vmem>>, vector<1x8x128xf32>
    %6 = vector.shape_cast %5 : vector<1x8x128xf32> to vector<8x128xf32>
    %7 = arith.maximumf %4, %6 : vector<8x128xf32>
    %c3 = arith.constant 3 : index
    %c0_6 = arith.constant 0 : index
    %c0_7 = arith.constant 0 : index
    %8 = vector.load %arg1[%c3, %c0_6, %c0_7] : memref<9x8x128xf32, #tpu.memory_space<vmem>>, vector<1x8x128xf32>
    %9 = vector.shape_cast %8 : vector<1x8x128xf32> to vector<8x128xf32>
    %10 = arith.maximumf %7, %9 : vector<8x128xf32>
    %c4 = arith.constant 4 : index
    %c0_8 = arith.constant 0 : index
    %c0_9 = arith.constant 0 : index
    %11 = vector.load %arg1[%c4, %c0_8, %c0_9] : memref<9x8x128xf32, #tpu.memory_space<vmem>>, vector<1x8x128xf32>
    %12 = vector.shape_cast %11 : vector<1x8x128xf32> to vector<8x128xf32>
    %13 = arith.maximumf %10, %12 : vector<8x128xf32>
    %c5 = arith.constant 5 : index
    %c0_10 = arith.constant 0 : index
    %c0_11 = arith.constant 0 : index
    %14 = vector.load %arg1[%c5, %c0_10, %c0_11] : memref<9x8x128xf32, #tpu.memory_space<vmem>>, vector<1x8x128xf32>
    %15 = vector.shape_cast %14 : vector<1x8x128xf32> to vector<8x128xf32>
    %16 = arith.maximumf %13, %15 : vector<8x128xf32>
    %c6 = arith.constant 6 : index
    %c0_12 = arith.constant 0 : index
    %c0_13 = arith.constant 0 : index
    %17 = vector.load %arg1[%c6, %c0_12, %c0_13] : memref<9x8x128xf32, #tpu.memory_space<vmem>>, vector<1x8x128xf32>
    %18 = vector.shape_cast %17 : vector<1x8x128xf32> to vector<8x128xf32>
    %19 = arith.maximumf %16, %18 : vector<8x128xf32>
    %c7 = arith.constant 7 : index
    %c0_14 = arith.constant 0 : index
    %c0_15 = arith.constant 0 : index
    %20 = vector.load %arg1[%c7, %c0_14, %c0_15] : memref<9x8x128xf32, #tpu.memory_space<vmem>>, vector<1x8x128xf32>
    %21 = vector.shape_cast %20 : vector<1x8x128xf32> to vector<8x128xf32>
    %22 = arith.maximumf %19, %21 : vector<8x128xf32>
    %c8 = arith.constant 8 : index
    %c0_16 = arith.constant 0 : index
    %c0_17 = arith.constant 0 : index
    %23 = vector.load %arg1[%c8, %c0_16, %c0_17] : memref<9x8x128xf32, #tpu.memory_space<vmem>>, vector<1x8x128xf32>
    %24 = vector.shape_cast %23 : vector<1x8x128xf32> to vector<8x128xf32>
    %25 = arith.maximumf %22, %24 : vector<8x128xf32>
    %c0_18 = arith.constant 0 : index
    %c0_19 = arith.constant 0 : index
    %26 = vector.load %arg2[%c0_18, %c0_19] : memref<8x128xf32, #tpu.memory_space<vmem>>, vector<8x128xf32>
    tpu.vector_store %arg2[%c0_18, %c0_19], %25 {strides = array<i32>} : memref<8x128xf32, #tpu.memory_space<vmem>>, vector<8x128xf32>,
    return
  }
  func.func @transform_0(%arg0: i32) -> (i32, i32, i32) {
    %c0_i32 = arith.constant 0 : i32
    %c0_i32_0 = arith.constant 0 : i32
    %c0_i32_1 = arith.constant 0 : i32
    return %c0_i32, %arg0, %c0_i32_0 : i32, i32, i32
  }
  func.func @transform_1(%arg0: i32) -> (i32, i32) {
    %c0_i32 = arith.constant 0 : i32
    %c0_i32_0 = arith.constant 0 : i32
    return %arg0, %c0_i32 : i32, i32
  }
}

</mosaic_0001>

<llo_original>
// kernel: tpu_custom_call.1
$region0: #{tpu_custom_call.1}
  #allocation0 [shape = 'u32[]', space=smem, size = 0x4, offset = 0x4, fixed_abs, tag = 'smem constant byte address 0x4 - core index']
  #allocation1 [shape = 'u32[72,128]{1,0:T(1,128)}', space=vmem, size = 0x9000, scoped, tag = 'internal scratch']
  %s0 = inlined_call_operand.hbm [shape: f32[9,8,128], index: 0, kind: input, shape index: {}]
  %s1 = inlined_call_operand.hbm [shape: f32[8,128], index: 1, kind: output, shape index: {}]
  %s2 = sld [smem:[#allocation0]]
  $region18: #{tpu_custom_call.1} parent=0
    _
  %s4 = ssub.s32 1, %s2
  %s5 = scalar_select 0, %s4, %s2
  $region1: #{tpu_custom_call.1} parent=0
    #allocation2 [shape = 'u8[36864]{0}', space=vmem, size = 0x9000, scoped, tag = 'input window, operand 0, single buffered']
    #allocation3 [shape = 's32[1]{0}', space=sflag, size = 0x4, scoped, tag = 'scoped memory for tpu_custom_call.1']
    #allocation4 [shape = 's32[1]{0}', space=sflag, size = 0x4, scoped, tag = 'scoped memory for tpu_custom_call.1']
    #allocation5 [shape = 'u8[4096]{0}', space=vmem, size = 0x1000, scoped, tag = 'output window, operand 0, single buffered']
    %6 = vsyncpa [#allocation3], 0
    %7 = vsyncpa [#allocation4], 0
    // Predicated region
    $region2: #{tpu_custom_call.1} parent=1 // pred_check
      _
    $region3: #{tpu_custom_call.1} parent=1 // pred_check_branch
      %9 = sbr.rel (0) target = $region5
    $region4: #{tpu_custom_call.1} parent=1 // pred_region
      %11 = vsyncadd [#allocation3], 0
      %s12 = sshll.u32 %s0, 4
      %s13 = int_to_ptr.hbm [resolvable:$true] %s12
      %s14 = sshll.u32 [#allocation2], 4
      %s15 = int_to_ptr.vmem [resolvable:$true] %s14
      %20 = dma.hbm_to_vmem [thread:$0]  %s13, 1152, %s15, [#allocation3], 128, 128, 8
    $region5: #{tpu_custom_call.1} parent=1 // pred_fallthru
      _
    // Predicated region
    $region6: #{tpu_custom_call.1} parent=1 // pred_check
      _
    $region7: #{tpu_custom_call.1} parent=1 // pred_check_branch
      %22 = sbr.rel (0) target = $region9
    $region8: #{tpu_custom_call.1} parent=1 // pred_region
      %24 = dma.done [#allocation3], 1152
    $region9: #{tpu_custom_call.1} parent=1 // pred_fallthru
      _
    %v25 = vld [vmem:[#allocation2] sm:$0xff]
    %s26 = scalar_lea.vmem [#allocation2], 8
    %v27 = vld [vmem:[%s26] sm:$0xff]
    %v28 = vmax.f32 %v25, %v27
    %s29 = scalar_lea.vmem [#allocation2], 16
    %v30 = vld [vmem:[%s29] sm:$0xff]
    %v31 = vmax.f32 %v28, %v30
    %s32 = scalar_lea.vmem [#allocation2], 24
    %v33 = vld [vmem:[%s32] sm:$0xff]
    %v34 = vmax.f32 %v31, %v33
    %s35 = scalar_lea.vmem [#allocation2], 32
    %v36 = vld [vmem:[%s35] sm:$0xff]
    %v37 = vmax.f32 %v34, %v36
    %s38 = scalar_lea.vmem [#allocation2], 40
    %v39 = vld [vmem:[%s38] sm:$0xff]
    %v40 = vmax.f32 %v37, %v39
    %s41 = scalar_lea.vmem [#allocation2], 48
    %v42 = vld [vmem:[%s41] sm:$0xff]
    %v43 = vmax.f32 %v40, %v42
    %s44 = scalar_lea.vmem [#allocation2], 56
    %v45 = vld [vmem:[%s44] sm:$0xff]
    %v46 = vmax.f32 %v43, %v45
    %s47 = scalar_lea.vmem [#allocation2], 64
    %v48 = vld [vmem:[%s47] sm:$0xff]
    %v49 = vmax.f32 %v46, %v48
    %50 = vst [vmem:[#allocation5] sm:$0xff] %v49
    // Predicated region
    $region10: #{tpu_custom_call.1} parent=1 // pred_check
      _
    $region11: #{tpu_custom_call.1} parent=1 // pred_check_branch
      %52 = sbr.rel (0) target = $region13
    $region12: #{tpu_custom_call.1} parent=1 // pred_region
      %54 = vsyncadd [#allocation4], 0
      %s56 = sshll.u32 [#allocation5], 4
      %s57 = int_to_ptr.vmem [resolvable:$true] %s56
      %s58 = sshll.u32 %s1, 4
      %s59 = int_to_ptr.hbm [resolvable:$true] %s58
      %61 = dma.vmem_to_hbm [thread:$0]  %s57, 128, %s59, [#allocation4]
    $region13: #{tpu_custom_call.1} parent=1 // pred_fallthru
      _
    // Predicated region
    $region14: #{tpu_custom_call.1} parent=1 // pred_check
      _
    $region15: #{tpu_custom_call.1} parent=1 // pred_check_branch
      %63 = sbr.rel (0) target = $region17
    $region16: #{tpu_custom_call.1} parent=1 // pred_region
      %65 = dma.done [#allocation4], 128
    $region17: #{tpu_custom_call.1} parent=1 // pred_fallthru
      _
    %66 = vsyncpa [#allocation3], 1
    %67 = vsyncpa [#allocation4], 1

</llo_original>
